<compile_context>
chip_gen: v7x
topology: tpu7x:2x2x1
jax: 0.10.0
libtpu: 0.0.40
codegen_flags: <defaults>
</compile_context>

<pallas_src>
import jax
import jax.numpy as jnp
from jax.experimental import pallas as pl
from jax.experimental.pallas import tpu as pltpu

_LANE = 128      # lane width
_SUB = 16        # batch-tile granularity (covers f32 and bf16 sublane packing)
_N_PAD = 128     # padded output width (lane-dense store; cols 0/1 are real)


def _round_up(x, m):
    return ((x + m - 1) // m) * m


def _pad_to(a, shape):
    pads = [(0, t - s) for s, t in zip(a.shape, shape)]
    if all(p == (0, 0) for p in pads):
        return a
    return jnp.pad(a, pads)


def _disc_kernel(x_ref,
                 w1_ref, b1_ref,
                 w2_ref, b2_ref,
                 w3_ref, b3_ref,
                 w4_ref, b4_ref,
                 out_ref):
    """One batch tile of the discriminator MLP.

    x_ref : (TB, D)   compute dtype (bf16 or f32), true (unpadded) feature dim
    wN_ref: padded weights (compute dtype); bN_ref: padded biases (f32)
    out_ref: (TB, 128) -- columns 0/1 hold the softmax probs, rest padding.
    """
    cdt = w1_ref.dtype

    h = jnp.dot(x_ref[...], w1_ref[...],
                preferred_element_type=jnp.float32) + b1_ref[...]
    h = jnp.maximum(h, 0.0).astype(cdt)

    h = jnp.dot(h, w2_ref[...],
                preferred_element_type=jnp.float32) + b2_ref[...]
    h = jnp.maximum(h, 0.0).astype(cdt)

    h = jnp.dot(h, w3_ref[...],
                preferred_element_type=jnp.float32) + b3_ref[...]
    h = jnp.maximum(h, 0.0).astype(cdt)

    # Final layer already holds logit *differences*, so the 2-class softmax
    # reduces to an elementwise sigmoid: no cross-lane reduce, no divide.
    d = jnp.dot(h, w4_ref[...],
                preferred_element_type=jnp.float32) + b4_ref[...]
    out_ref[...] = (0.5 * (jnp.tanh(0.5 * d) + 1.0)).astype(out_ref.dtype)


def prepare_params(params, *, compute_dtype=jnp.bfloat16):
    """One-time softmax-fold + padding + dtype cast of the weights.

    Do this once and reuse the returned dict for every forward call so the
    per-call path never re-reads / re-writes the weight set in HBM.
    """
    D, hid = params["w1"].shape
    H_pad = _round_up(hid, _LANE)
    cdt = jnp.dtype(compute_dtype)

    # Fold the 2-class softmax into "difference" weights for the last layer:
    #   softmax(l)[:, j] == sigmoid(l[:, j] - l[:, 1-j])
    w4 = params["w4"]                       # (hid, 2)
    b4 = params["b4"]                       # (1, 2)
    w4_diff = jnp.stack((w4[:, 0] - w4[:, 1], w4[:, 1] - w4[:, 0]), axis=1)
    b4_diff = jnp.stack((b4[0, 0] - b4[0, 1], b4[0, 1] - b4[0, 0]))[None, :]

    return {
        "_prepared": True,
        "D": D,
        "hid": hid,
        "H_pad": H_pad,
        "compute_dtype": cdt,
        # w1 keeps its true input dim D (no K padding needed: x is streamed
        # unpadded and the MXU handles the short contraction directly).
        "w1p": _pad_to(params["w1"], (D, H_pad)).astype(cdt),
        "w2p": _pad_to(params["w2"], (H_pad, H_pad)).astype(cdt),
        "w3p": _pad_to(params["w3"], (H_pad, H_pad)).astype(cdt),
        "w4p": _pad_to(w4_diff, (H_pad, _N_PAD)).astype(cdt),
        "b1p": _pad_to(params["b1"], (1, H_pad)).astype(jnp.float32),
        "b2p": _pad_to(params["b2"], (1, H_pad)).astype(jnp.float32),
        "b3p": _pad_to(params["b3"], (1, H_pad)).astype(jnp.float32),
        "b4p": _pad_to(b4_diff, (1, _N_PAD)).astype(jnp.float32),
    }


def discriminator_forward(x, params, *, block_b=None, out_dtype=None):
    """x: (B, out_dim) float; params: raw init_params dict or prepare_params output."""
    if not isinstance(params, dict) or not params.get("_prepared", False):
        params = prepare_params(params)

    cdt = params["compute_dtype"]
    D = params["D"]
    H_pad = params["H_pad"]
    N_pad = _N_PAD
    if out_dtype is None:
        out_dtype = cdt            # narrow writeback on the mem-bound path

    B, Dx = x.shape
    assert Dx == D, f"expected input feature dim {D}, got {Dx}"

    # ---- batch tiling ------------------------------------------------------
    if block_b is None:
        block_b = min(512, _round_up(B, _SUB))
    block_b = max(_SUB, _round_up(block_b, _SUB))

    if block_b >= B and B > _SUB:
        # A single tile would cover the whole batch: split it so the
        # 'parallel' axis can feed both v7x TensorCores.
        block_b = max(_SUB, _round_up(pl.cdiv(B, 2), _SUB))
    grid_b = pl.cdiv(B, block_b)
    # Prefer an even number of batch tiles (v7x megacore) when it is cheap.
    while grid_b > 1 and grid_b % 2 == 1 and block_b > 64:
        block_b = max(_SUB, _round_up(block_b // 2, _SUB))
        grid_b = pl.cdiv(B, block_b)
    B_pad = grid_b * block_b

    # Only the batch axis is padded; the feature axis keeps its true size D.
    xp = _pad_to(x, (B_pad, D)).astype(cdt)

    inputs = (xp,
              params["w1p"], params["b1p"],
              params["w2p"], params["b2p"],
              params["w3p"], params["b3p"],
              params["w4p"], params["b4p"])

    cbytes = jnp.dtype(cdt).itemsize
    obytes = jnp.dtype(out_dtype).itemsize

    def _build(weight_bufs):
        if weight_bufs == 1 and hasattr(pl, "Buffered"):
            def wspec(shape):
                return pl.BlockSpec(shape, lambda i: (0, 0),
                                    pipeline_mode=pl.Buffered(1))
            wfactor = 1
        else:
            def wspec(shape):
                return pl.BlockSpec(shape, lambda i: (0, 0))
            wfactor = 2

        in_specs = [
            pl.BlockSpec((block_b, D), lambda i: (i, 0)),   # x tile (pipelined)
            wspec((D, H_pad)),      # w1
            wspec((1, H_pad)),      # b1
            wspec((H_pad, H_pad)),  # w2
            wspec((1, H_pad)),      # b2
            wspec((H_pad, H_pad)),  # w3
            wspec((1, H_pad)),      # b3
            wspec((H_pad, N_pad)),  # w4 (diff form)
            wspec((1, N_pad)),      # b4 (diff form)
        ]
        out_specs = pl.BlockSpec((block_b, N_pad), lambda i: (i, 0))

        # Scoped-VMEM budget: resident weights (x1 if single-buffered) +
        # double-buffered activation / output tiles + f32 working set + slack,
        # clamped generation-aware (64 MiB fallback is safe on v7x).
        resident = wfactor * (
            (D * H_pad + 2 * H_pad * H_pad + H_pad * N_pad) * cbytes
            + (3 * H_pad + N_pad) * 4)
        streamed = 2 * block_b * (D * cbytes + N_pad * obytes)
        working = 4 * block_b * H_pad * 4
        request = resident + streamed + working + (4 << 20)
        try:
            cap = int(pltpu.get_tpu_info().vmem_capacity_bytes) - (8 << 20)
        except Exception:
            cap = 64 << 20
        vmem_limit = int(min(cap, max(16 << 20, request)))

        return pl.pallas_call(
            _disc_kernel,
            out_shape=jax.ShapeDtypeStruct((B_pad, N_pad), out_dtype),
            grid=(grid_b,),
            in_specs=in_specs,
            out_specs=out_specs,
            compiler_params=pltpu.CompilerParams(
                dimension_semantics=("parallel",),
                vmem_limit_bytes=vmem_limit),
        )

    try:
        out_padded = _build(1)(*inputs)       # single-buffered resident weights
    except Exception:
        out_padded = _build(2)(*inputs)       # fallback: default double-buffering

    return out_padded[:B, :2]


def init_params(key, out_dim):
    """nn.Linear-style init U(-1/sqrt(fan_in), +1/sqrt(fan_in)).

    Weights stored (in_features, out_features) to match the x @ W convention.
    """
    hid = 10 * out_dim
    dims = [(out_dim, hid), (hid, hid), (hid, hid), (hid, 2)]
    params = {}
    for i, (fan_in, fan_out) in enumerate(dims, start=1):
        key, kw, kb = jax.random.split(key, 3)
        bound = 1.0 / (fan_in ** 0.5)
        params[f"w{i}"] = jax.random.uniform(
            kw, (fan_in, fan_out), jnp.float32, minval=-bound, maxval=bound)
        params[f"b{i}"] = jax.random.uniform(
            kb, (1, fan_out), jnp.float32, minval=-bound, maxval=bound)
    return params


def _reference_forward(x, p):
    h = jnp.maximum(x @ p["w1"] + p["b1"], 0.0)
    h = jnp.maximum(h @ p["w2"] + p["b2"], 0.0)
    h = jnp.maximum(h @ p["w3"] + p["b3"], 0.0)
    logits = h @ p["w4"] + p["b4"]
    return jax.nn.softmax(logits, axis=1)


if __name__ == "__main__":
    out_dim = 8
    batch = 4

    key = jax.random.PRNGKey(0)
    key, kx = jax.random.split(key)
    x = jax.random.normal(kx, (batch, out_dim), jnp.float32)
    params = init_params(key, out_dim)

    y_ref = _reference_forward(x, params)

    # f32 everything: tight check against the JAX reference.
    prep_f32 = prepare_params(params, compute_dtype=jnp.float32)
    y32 = jax.block_until_ready(discriminator_forward(x, prep_f32))
    assert y32.shape == (batch, 2)
    assert jnp.allclose(y32, y_ref, atol=1e-5, rtol=1e-5), "f32 mismatch vs reference"
    assert jnp.allclose(jnp.sum(y32, axis=1), 1.0, atol=1e-5), "rows must sum to 1"

    # Default fast path: bf16 operands + bf16 output, f32 MXU accumulation.
    prep_bf16 = prepare_params(params)                    # bf16 default
    y16 = jax.block_until_ready(discriminator_forward(x, prep_bf16))
    assert y16.shape == (batch, 2)
    y16f = y16.astype(jnp.float32)
    assert jnp.allclose(y16f, y_ref, atol=5e-2, rtol=0), "bf16 mismatch vs reference"
    assert jnp.allclose(jnp.sum(y16f, axis=1), 1.0, atol=2e-2), "bf16 rows must sum to 1"

    print("KERNEL_OK")
</pallas_src>

<mosaic_0001>
module attributes {stable_mosaic.version = 11 : i64} {
  func.func @_disc_kernel(%arg0: i32, %arg1: memref<16x8xf32, #tpu.memory_space<vmem>>, %arg2: memref<8x128xf32, #tpu.memory_space<vmem>>, %arg3: memref<1x128xf32, #tpu.memory_space<vmem>>, %arg4: memref<128x128xf32, #tpu.memory_space<vmem>>, %arg5: memref<1x128xf32, #tpu.memory_space<vmem>>, %arg6: memref<128x128xf32, #tpu.memory_space<vmem>>, %arg7: memref<1x128xf32, #tpu.memory_space<vmem>>, %arg8: memref<128x128xf32, #tpu.memory_space<vmem>>, %arg9: memref<1x128xf32, #tpu.memory_space<vmem>>, %arg10: memref<16x128xf32, #tpu.memory_space<vmem>>) attributes {dimension_semantics = [#tpu.dimension_semantics<parallel>], iteration_bounds = array<i64: 1>, scalar_prefetch = 0 : i64, scratch_operands = 0 : i64, tpu.core_type = #tpu.core_type<tc>, window_params = [{transform_indices = @transform_0, window_bounds = array<i64: 16, 8>}, {pipeline_mode = #tpu.pipeline_mode<synchronous>, transform_indices = @transform_1, window_bounds = array<i64: 8, 128>}, {pipeline_mode = #tpu.pipeline_mode<synchronous>, transform_indices = @transform_2, window_bounds = array<i64: 1, 128>}, {pipeline_mode = #tpu.pipeline_mode<synchronous>, transform_indices = @transform_3, window_bounds = array<i64: 128, 128>}, {pipeline_mode = #tpu.pipeline_mode<synchronous>, transform_indices = @transform_4, window_bounds = array<i64: 1, 128>}, {pipeline_mode = #tpu.pipeline_mode<synchronous>, transform_indices = @transform_5, window_bounds = array<i64: 128, 128>}, {pipeline_mode = #tpu.pipeline_mode<synchronous>, transform_indices = @transform_6, window_bounds = array<i64: 1, 128>}, {pipeline_mode = #tpu.pipeline_mode<synchronous>, transform_indices = @transform_7, window_bounds = array<i64: 128, 128>}, {pipeline_mode = #tpu.pipeline_mode<synchronous>, transform_indices = @transform_8, window_bounds = array<i64: 1, 128>}, {transform_indices = @transform_9, window_bounds = array<i64: 16, 128>}]} {
    %c0 = arith.constant 0 : index
    %c0_0 = arith.constant 0 : index
    %0 = vector.load %arg1[%c0, %c0_0] : memref<16x8xf32, #tpu.memory_space<vmem>>, vector<16x8xf32>
    %c0_1 = arith.constant 0 : index
    %c0_2 = arith.constant 0 : index
    %1 = vector.load %arg2[%c0_1, %c0_2] : memref<8x128xf32, #tpu.memory_space<vmem>>, vector<8x128xf32>
    %cst = arith.constant dense<0.000000e+00> : vector<16x128xf32>
    %2 = tpu.matmul %0, %1, %cst {dimension_numbers = #tpu.dot_dimension_numbers<[1], [0], [0], [1], [0, 0, 1, 1], [], []>} : vector<16x8xf32>, vector<8x128xf32>, vector<16x128xf32> -> vector<16x128xf32>
    %c0_3 = arith.constant 0 : index
    %c0_4 = arith.constant 0 : index
    %3 = vector.load %arg3[%c0_3, %c0_4] : memref<1x128xf32, #tpu.memory_space<vmem>>, vector<1x128xf32>
    %4 = vector.broadcast %3 : vector<1x128xf32> to vector<16x128xf32>
    %5 = arith.addf %2, %4 : vector<16x128xf32>
    %cst_5 = arith.constant 0.000000e+00 : f32
    %6 = vector.broadcast %cst_5 : f32 to vector<16x128xf32>
    %7 = arith.maximumf %5, %6 : vector<16x128xf32>
    %c0_6 = arith.constant 0 : index
    %c0_7 = arith.constant 0 : index
    %8 = vector.load %arg4[%c0_6, %c0_7] : memref<128x128xf32, #tpu.memory_space<vmem>>, vector<128x128xf32>
    %cst_8 = arith.constant dense<0.000000e+00> : vector<16x128xf32>
    %9 = tpu.matmul %7, %8, %cst_8 {dimension_numbers = #tpu.dot_dimension_numbers<[1], [0], [0], [1], [0, 0, 1, 1], [], []>} : vector<16x128xf32>, vector<128x128xf32>, vector<16x128xf32> -> vector<16x128xf32>
    %c0_9 = arith.constant 0 : index
    %c0_10 = arith.constant 0 : index
    %10 = vector.load %arg5[%c0_9, %c0_10] : memref<1x128xf32, #tpu.memory_space<vmem>>, vector<1x128xf32>
    %11 = vector.broadcast %10 : vector<1x128xf32> to vector<16x128xf32>
    %12 = arith.addf %9, %11 : vector<16x128xf32>
    %cst_11 = arith.constant 0.000000e+00 : f32
    %13 = vector.broadcast %cst_11 : f32 to vector<16x128xf32>
    %14 = arith.maximumf %12, %13 : vector<16x128xf32>
    %c0_12 = arith.constant 0 : index
    %c0_13 = arith.constant 0 : index
    %15 = vector.load %arg6[%c0_12, %c0_13] : memref<128x128xf32, #tpu.memory_space<vmem>>, vector<128x128xf32>
    %cst_14 = arith.constant dense<0.000000e+00> : vector<16x128xf32>
    %16 = tpu.matmul %14, %15, %cst_14 {dimension_numbers = #tpu.dot_dimension_numbers<[1], [0], [0], [1], [0, 0, 1, 1], [], []>} : vector<16x128xf32>, vector<128x128xf32>, vector<16x128xf32> -> vector<16x128xf32>
    %c0_15 = arith.constant 0 : index
    %c0_16 = arith.constant 0 : index
    %17 = vector.load %arg7[%c0_15, %c0_16] : memref<1x128xf32, #tpu.memory_space<vmem>>, vector<1x128xf32>
    %18 = vector.broadcast %17 : vector<1x128xf32> to vector<16x128xf32>
    %19 = arith.addf %16, %18 : vector<16x128xf32>
    %cst_17 = arith.constant 0.000000e+00 : f32
    %20 = vector.broadcast %cst_17 : f32 to vector<16x128xf32>
    %21 = arith.maximumf %19, %20 : vector<16x128xf32>
    %c0_18 = arith.constant 0 : index
    %c0_19 = arith.constant 0 : index
    %22 = vector.load %arg8[%c0_18, %c0_19] : memref<128x128xf32, #tpu.memory_space<vmem>>, vector<128x128xf32>
    %cst_20 = arith.constant dense<0.000000e+00> : vector<16x128xf32>
    %23 = tpu.matmul %21, %22, %cst_20 {dimension_numbers = #tpu.dot_dimension_numbers<[1], [0], [0], [1], [0, 0, 1, 1], [], []>} : vector<16x128xf32>, vector<128x128xf32>, vector<16x128xf32> -> vector<16x128xf32>
    %c0_21 = arith.constant 0 : index
    %c0_22 = arith.constant 0 : index
    %24 = vector.load %arg9[%c0_21, %c0_22] : memref<1x128xf32, #tpu.memory_space<vmem>>, vector<1x128xf32>
    %25 = vector.broadcast %24 : vector<1x128xf32> to vector<16x128xf32>
    %26 = arith.addf %23, %25 : vector<16x128xf32>
    %cst_23 = arith.constant 5.000000e-01 : f32
    %27 = vector.broadcast %cst_23 : f32 to vector<16x128xf32>
    %28 = arith.mulf %27, %26 : vector<16x128xf32>
    %29 = math.tanh %28 : vector<16x128xf32>
    %cst_24 = arith.constant 1.000000e+00 : f32
    %30 = vector.broadcast %cst_24 : f32 to vector<16x128xf32>
    %31 = arith.addf %29, %30 : vector<16x128xf32>
    %cst_25 = arith.constant 5.000000e-01 : f32
    %32 = vector.broadcast %cst_25 : f32 to vector<16x128xf32>
    %33 = arith.mulf %32, %31 : vector<16x128xf32>
    %c0_26 = arith.constant 0 : index
    %c0_27 = arith.constant 0 : index
    %34 = vector.load %arg10[%c0_26, %c0_27] : memref<16x128xf32, #tpu.memory_space<vmem>>, vector<16x128xf32>
    tpu.vector_store %arg10[%c0_26, %c0_27], %33 {strides = array<i32>} : memref<16x128xf32, #tpu.memory_space<vmem>>, vector<16x128xf32>,
    return
  }
  func.func @transform_0(%arg0: i32) -> (i32, i32) {
    %c0_i32 = arith.constant 0 : i32
    %c0_i32_0 = arith.constant 0 : i32
    return %arg0, %c0_i32 : i32, i32
  }
  func.func @transform_1(%arg0: i32) -> (i32, i32) {
    %c0_i32 = arith.constant 0 : i32
    %c0_i32_0 = arith.constant 0 : i32
    %c0_i32_1 = arith.constant 0 : i32
    return %c0_i32, %c0_i32_0 : i32, i32
  }
  func.func @transform_2(%arg0: i32) -> (i32, i32) {
    %c0_i32 = arith.constant 0 : i32
    %c0_i32_0 = arith.constant 0 : i32
    %c0_i32_1 = arith.constant 0 : i32
    return %c0_i32, %c0_i32_0 : i32, i32
  }
  func.func @transform_3(%arg0: i32) -> (i32, i32) {
    %c0_i32 = arith.constant 0 : i32
    %c0_i32_0 = arith.constant 0 : i32
    %c0_i32_1 = arith.constant 0 : i32
    return %c0_i32, %c0_i32_0 : i32, i32
  }
  func.func @transform_4(%arg0: i32) -> (i32, i32) {
    %c0_i32 = arith.constant 0 : i32
    %c0_i32_0 = arith.constant 0 : i32
    %c0_i32_1 = arith.constant 0 : i32
    return %c0_i32, %c0_i32_0 : i32, i32
  }
  func.func @transform_5(%arg0: i32) -> (i32, i32) {
    %c0_i32 = arith.constant 0 : i32
    %c0_i32_0 = arith.constant 0 : i32
    %c0_i32_1 = arith.constant 0 : i32
    return %c0_i32, %c0_i32_0 : i32, i32
  }
  func.func @transform_6(%arg0: i32) -> (i32, i32) {
    %c0_i32 = arith.constant 0 : i32
    %c0_i32_0 = arith.constant 0 : i32
    %c0_i32_1 = arith.constant 0 : i32
    return %c0_i32, %c0_i32_0 : i32, i32
  }
  func.func @transform_7(%arg0: i32) -> (i32, i32) {
    %c0_i32 = arith.constant 0 : i32
    %c0_i32_0 = arith.constant 0 : i32
    %c0_i32_1 = arith.constant 0 : i32
    return %c0_i32, %c0_i32_0 : i32, i32
  }
  func.func @transform_8(%arg0: i32) -> (i32, i32) {
    %c0_i32 = arith.constant 0 : i32
    %c0_i32_0 = arith.constant 0 : i32
    %c0_i32_1 = arith.constant 0 : i32
    return %c0_i32, %c0_i32_0 : i32, i32
  }
  func.func @transform_9(%arg0: i32) -> (i32, i32) {
    %c0_i32 = arith.constant 0 : i32
    %c0_i32_0 = arith.constant 0 : i32
    return %arg0, %c0_i32 : i32, i32
  }
}

module attributes {stable_mosaic.version = 11 : i64} {
  func.func @_disc_kernel(%arg0: i32, %arg1: memref<16x8xf32, #tpu.memory_space<vmem>>, %arg2: memref<8x128xf32, #tpu.memory_space<vmem>>, %arg3: memref<1x128xf32, #tpu.memory_space<vmem>>, %arg4: memref<128x128xf32, #tpu.memory_space<vmem>>, %arg5: memref<1x128xf32, #tpu.memory_space<vmem>>, %arg6: memref<128x128xf32, #tpu.memory_space<vmem>>, %arg7: memref<1x128xf32, #tpu.memory_space<vmem>>, %arg8: memref<128x128xf32, #tpu.memory_space<vmem>>, %arg9: memref<1x128xf32, #tpu.memory_space<vmem>>, %arg10: memref<16x128xf32, #tpu.memory_space<vmem>>) attributes {dimension_semantics = [#tpu.dimension_semantics<parallel>], iteration_bounds = array<i64: 1>, scalar_prefetch = 0 : i64, scratch_operands = 0 : i64, tpu.core_type = #tpu.core_type<tc>, window_params = [{transform_indices = @transform_0, window_bounds = array<i64: 16, 8>}, {pipeline_mode = #tpu.pipeline_mode<synchronous>, transform_indices = @transform_1, window_bounds = array<i64: 8, 128>}, {pipeline_mode = #tpu.pipeline_mode<synchronous>, transform_indices = @transform_2, window_bounds = array<i64: 1, 128>}, {pipeline_mode = #tpu.pipeline_mode<synchronous>, transform_indices = @transform_3, window_bounds = array<i64: 128, 128>}, {pipeline_mode = #tpu.pipeline_mode<synchronous>, transform_indices = @transform_4, window_bounds = array<i64: 1, 128>}, {pipeline_mode = #tpu.pipeline_mode<synchronous>, transform_indices = @transform_5, window_bounds = array<i64: 128, 128>}, {pipeline_mode = #tpu.pipeline_mode<synchronous>, transform_indices = @transform_6, window_bounds = array<i64: 1, 128>}, {pipeline_mode = #tpu.pipeline_mode<synchronous>, transform_indices = @transform_7, window_bounds = array<i64: 128, 128>}, {pipeline_mode = #tpu.pipeline_mode<synchronous>, transform_indices = @transform_8, window_bounds = array<i64: 1, 128>}, {transform_indices = @transform_9, window_bounds = array<i64: 16, 128>}]} {
    %c0 = arith.constant 0 : index
    %c0_0 = arith.constant 0 : index
    %0 = vector.load %arg1[%c0, %c0_0] : memref<16x8xf32, #tpu.memory_space<vmem>>, vector<16x8xf32>
    %c0_1 = arith.constant 0 : index
    %c0_2 = arith.constant 0 : index
    %1 = vector.load %arg2[%c0_1, %c0_2] : memref<8x128xf32, #tpu.memory_space<vmem>>, vector<8x128xf32>
    %cst = arith.constant dense<0.000000e+00> : vector<16x128xf32>
    %2 = tpu.matmul %0, %1, %cst {dimension_numbers = #tpu.dot_dimension_numbers<[1], [0], [0], [1], [0, 0, 1, 1], [], []>} : vector<16x8xf32>, vector<8x128xf32>, vector<16x128xf32> -> vector<16x128xf32>
    %c0_3 = arith.constant 0 : index
    %c0_4 = arith.constant 0 : index
    %3 = vector.load %arg3[%c0_3, %c0_4] : memref<1x128xf32, #tpu.memory_space<vmem>>, vector<1x128xf32>
    %4 = vector.broadcast %3 : vector<1x128xf32> to vector<16x128xf32>
    %5 = arith.addf %2, %4 : vector<16x128xf32>
    %cst_5 = arith.constant 0.000000e+00 : f32
    %6 = vector.broadcast %cst_5 : f32 to vector<16x128xf32>
    %7 = arith.maximumf %5, %6 : vector<16x128xf32>
    %c0_6 = arith.constant 0 : index
    %c0_7 = arith.constant 0 : index
    %8 = vector.load %arg4[%c0_6, %c0_7] : memref<128x128xf32, #tpu.memory_space<vmem>>, vector<128x128xf32>
    %cst_8 = arith.constant dense<0.000000e+00> : vector<16x128xf32>
    %9 = tpu.matmul %7, %8, %cst_8 {dimension_numbers = #tpu.dot_dimension_numbers<[1], [0], [0], [1], [0, 0, 1, 1], [], []>} : vector<16x128xf32>, vector<128x128xf32>, vector<16x128xf32> -> vector<16x128xf32>
    %c0_9 = arith.constant 0 : index
    %c0_10 = arith.constant 0 : index
    %10 = vector.load %arg5[%c0_9, %c0_10] : memref<1x128xf32, #tpu.memory_space<vmem>>, vector<1x128xf32>
    %11 = vector.broadcast %10 : vector<1x128xf32> to vector<16x128xf32>
    %12 = arith.addf %9, %11 : vector<16x128xf32>
    %cst_11 = arith.constant 0.000000e+00 : f32
    %13 = vector.broadcast %cst_11 : f32 to vector<16x128xf32>
    %14 = arith.maximumf %12, %13 : vector<16x128xf32>
    %c0_12 = arith.constant 0 : index
    %c0_13 = arith.constant 0 : index
    %15 = vector.load %arg6[%c0_12, %c0_13] : memref<128x128xf32, #tpu.memory_space<vmem>>, vector<128x128xf32>
    %cst_14 = arith.constant dense<0.000000e+00> : vector<16x128xf32>
    %16 = tpu.matmul %14, %15, %cst_14 {dimension_numbers = #tpu.dot_dimension_numbers<[1], [0], [0], [1], [0, 0, 1, 1], [], []>} : vector<16x128xf32>, vector<128x128xf32>, vector<16x128xf32> -> vector<16x128xf32>
    %c0_15 = arith.constant 0 : index
    %c0_16 = arith.constant 0 : index
    %17 = vector.load %arg7[%c0_15, %c0_16] : memref<1x128xf32, #tpu.memory_space<vmem>>, vector<1x128xf32>
    %18 = vector.broadcast %17 : vector<1x128xf32> to vector<16x128xf32>
    %19 = arith.addf %16, %18 : vector<16x128xf32>
    %cst_17 = arith.constant 0.000000e+00 : f32
    %20 = vector.broadcast %cst_17 : f32 to vector<16x128xf32>
    %21 = arith.maximumf %19, %20 : vector<16x128xf32>
    %c0_18 = arith.constant 0 : index
    %c0_19 = arith.constant 0 : index
    %22 = vector.load %arg8[%c0_18, %c0_19] : memref<128x128xf32, #tpu.memory_space<vmem>>, vector<128x128xf32>
    %cst_20 = arith.constant dense<0.000000e+00> : vector<16x128xf32>
    %23 = tpu.matmul %21, %22, %cst_20 {dimension_numbers = #tpu.dot_dimension_numbers<[1], [0], [0], [1], [0, 0, 1, 1], [], []>} : vector<16x128xf32>, vector<128x128xf32>, vector<16x128xf32> -> vector<16x128xf32>
    %c0_21 = arith.constant 0 : index
    %c0_22 = arith.constant 0 : index
    %24 = vector.load %arg9[%c0_21, %c0_22] : memref<1x128xf32, #tpu.memory_space<vmem>>, vector<1x128xf32>
    %25 = vector.broadcast %24 : vector<1x128xf32> to vector<16x128xf32>
    %26 = arith.addf %23, %25 : vector<16x128xf32>
    %cst_23 = arith.constant 5.000000e-01 : f32
    %27 = vector.broadcast %cst_23 : f32 to vector<16x128xf32>
    %28 = arith.mulf %27, %26 : vector<16x128xf32>
    %29 = math.tanh %28 : vector<16x128xf32>
    %cst_24 = arith.constant 1.000000e+00 : f32
    %30 = vector.broadcast %cst_24 : f32 to vector<16x128xf32>
    %31 = arith.addf %29, %30 : vector<16x128xf32>
    %cst_25 = arith.constant 5.000000e-01 : f32
    %32 = vector.broadcast %cst_25 : f32 to vector<16x128xf32>
    %33 = arith.mulf %32, %31 : vector<16x128xf32>
    %c0_26 = arith.constant 0 : index
    %c0_27 = arith.constant 0 : index
    %34 = vector.load %arg10[%c0_26, %c0_27] : memref<16x128xf32, #tpu.memory_space<vmem>>, vector<16x128xf32>
    tpu.vector_store %arg10[%c0_26, %c0_27], %33 {strides = array<i32>} : memref<16x128xf32, #tpu.memory_space<vmem>>, vector<16x128xf32>,
    return
  }
  func.func @transform_0(%arg0: i32) -> (i32, i32) {
    %c0_i32 = arith.constant 0 : i32
    %c0_i32_0 = arith.constant 0 : i32
    return %arg0, %c0_i32 : i32, i32
  }
  func.func @transform_1(%arg0: i32) -> (i32, i32) {
    %c0_i32 = arith.constant 0 : i32
    %c0_i32_0 = arith.constant 0 : i32
    %c0_i32_1 = arith.constant 0 : i32
    return %c0_i32, %c0_i32_0 : i32, i32
  }
  func.func @transform_2(%arg0: i32) -> (i32, i32) {
    %c0_i32 = arith.constant 0 : i32
    %c0_i32_0 = arith.constant 0 : i32
    %c0_i32_1 = arith.constant 0 : i32
    return %c0_i32, %c0_i32_0 : i32, i32
  }
  func.func @transform_3(%arg0: i32) -> (i32, i32) {
    %c0_i32 = arith.constant 0 : i32
    %c0_i32_0 = arith.constant 0 : i32
    %c0_i32_1 = arith.constant 0 : i32
    return %c0_i32, %c0_i32_0 : i32, i32
  }
  func.func @transform_4(%arg0: i32) -> (i32, i32) {
    %c0_i32 = arith.constant 0 : i32
    %c0_i32_0 = arith.constant 0 : i32
    %c0_i32_1 = arith.constant 0 : i32
    return %c0_i32, %c0_i32_0 : i32, i32
  }
  func.func @transform_5(%arg0: i32) -> (i32, i32) {
    %c0_i32 = arith.constant 0 : i32
    %c0_i32_0 = arith.constant 0 : i32
    %c0_i32_1 = arith.constant 0 : i32
    return %c0_i32, %c0_i32_0 : i32, i32
  }
  func.func @transform_6(%arg0: i32) -> (i32, i32) {
    %c0_i32 = arith.constant 0 : i32
    %c0_i32_0 = arith.constant 0 : i32
    %c0_i32_1 = arith.constant 0 : i32
    return %c0_i32, %c0_i32_0 : i32, i32
  }
  func.func @transform_7(%arg0: i32) -> (i32, i32) {
    %c0_i32 = arith.constant 0 : i32
    %c0_i32_0 = arith.constant 0 : i32
    %c0_i32_1 = arith.constant 0 : i32
    return %c0_i32, %c0_i32_0 : i32, i32
  }
  func.func @transform_8(%arg0: i32) -> (i32, i32) {
    %c0_i32 = arith.constant 0 : i32
    %c0_i32_0 = arith.constant 0 : i32
    %c0_i32_1 = arith.constant 0 : i32
    return %c0_i32, %c0_i32_0 : i32, i32
  }
  func.func @transform_9(%arg0: i32) -> (i32, i32) {
    %c0_i32 = arith.constant 0 : i32
    %c0_i32_0 = arith.constant 0 : i32
    return %arg0, %c0_i32 : i32, i32
  }
}

</mosaic_0001>

<llo_original>
// kernel: tpu_custom_call.1
$region0: #{tpu_custom_call.1}
  #allocation0 [shape = 'u32[]', space=smem, size = 0x4, offset = 0x4, fixed_abs, tag = 'smem constant byte address 0x4 - core index']
  #allocation1 [shape = 'u32[144,128]{1,0:T(1,128)}', space=vmem, size = 0x12000, scoped, tag = 'internal scratch']
  %s0 = inlined_call_operand.vmem [shape: f32[16,8], index: 0, kind: input, shape index: {}]
  %s1 = inlined_call_operand.vmem [shape: f32[8,128], index: 1, kind: input, shape index: {}]
  %s2 = inlined_call_operand.vmem [shape: f32[1,128], index: 2, kind: input, shape index: {}]
  %s3 = inlined_call_operand.hbm [shape: f32[128,128], index: 3, kind: input, shape index: {}]
  %s4 = inlined_call_operand.vmem [shape: f32[1,128], index: 4, kind: input, shape index: {}]
  %s5 = inlined_call_operand.hbm [shape: f32[128,128], index: 5, kind: input, shape index: {}]
  %s6 = inlined_call_operand.vmem [shape: f32[1,128], index: 6, kind: input, shape index: {}]
  %s7 = inlined_call_operand.hbm [shape: f32[128,128], index: 7, kind: input, shape index: {}]
  %s8 = inlined_call_operand.vmem [shape: f32[1,128], index: 8, kind: input, shape index: {}]
  %s9 = inlined_call_operand.hbm [shape: f32[16,128], index: 9, kind: output, shape index: {}]
  %s10 = sld [smem:[#allocation0]]
  $region58: #{tpu_custom_call.1} parent=0
    _
  %s12 = ssub.s32 1, %s10
  %s13 = scalar_select 0, %s12, %s10
  $region1: #{tpu_custom_call.1} parent=0
    #allocation2 [shape = 'u8[65536]{0}', space=vmem, size = 0x10000, scoped, tag = 'input window, operand 3, single buffered']
    #allocation3 [shape = 's32[1]{0}', space=sflag, size = 0x4, scoped, tag = 'scoped memory for tpu_custom_call.1']
    #allocation4 [shape = 's32[1]{0}', space=sflag, size = 0x4, scoped, tag = 'scoped memory for tpu_custom_call.1']
    #allocation5 [shape = 'u8[65536]{0}', space=vmem, size = 0x10000, scoped, tag = 'input window, operand 5, single buffered']
    #allocation6 [shape = 's32[1]{0}', space=sflag, size = 0x4, scoped, tag = 'scoped memory for tpu_custom_call.1']
    #allocation7 [shape = 'u8[65536]{0}', space=vmem, size = 0x10000, scoped, tag = 'input window, operand 7, single buffered']
    #allocation8 [shape = 'u8[8192]{0}', space=vmem, size = 0x2000, scoped, tag = 'output window, operand 0, single buffered']
    %14 = vsyncpa [#allocation3], 0
    %15 = vsyncpa [#allocation6], 0
    %16 = vsyncpa [#allocation4], 0
    // Predicated region
    $region2: #{tpu_custom_call.1} parent=1 // pred_check
      _
    $region3: #{tpu_custom_call.1} parent=1 // pred_check_branch
      %18 = sbr.rel (0) target = $region5
    $region4: #{tpu_custom_call.1} parent=1 // pred_region
      _
    $region5: #{tpu_custom_call.1} parent=1 // pred_fallthru
      _
    // Predicated region
    $region6: #{tpu_custom_call.1} parent=1 // pred_check
      _
    $region7: #{tpu_custom_call.1} parent=1 // pred_check_branch
      %20 = sbr.rel (0) target = $region9
    $region8: #{tpu_custom_call.1} parent=1 // pred_region
      _
    $region9: #{tpu_custom_call.1} parent=1 // pred_fallthru
      _
    // Predicated region
    $region10: #{tpu_custom_call.1} parent=1 // pred_check
      _
    $region11: #{tpu_custom_call.1} parent=1 // pred_check_branch
      %22 = sbr.rel (0) target = $region13
    $region12: #{tpu_custom_call.1} parent=1 // pred_region
      _
    $region13: #{tpu_custom_call.1} parent=1 // pred_fallthru
      _
    // Predicated region
    $region14: #{tpu_custom_call.1} parent=1 // pred_check
      _
    $region15: #{tpu_custom_call.1} parent=1 // pred_check_branch
      %24 = sbr.rel (0) target = $region17
    $region16: #{tpu_custom_call.1} parent=1 // pred_region
      %s26 = ssub.s32 2048, 2048
      %27 = vsyncadd [#allocation3], %s26
      %s28 = sshll.u32 [#allocation2], 4
      %s29 = int_to_ptr.vmem [resolvable:$true] %s28
      %34 = dma.hbm_to_vmem [thread:$0]  %s3, 2048, %s29, [#allocation3], 128, 128, 8
    $region17: #{tpu_custom_call.1} parent=1 // pred_fallthru
      _
    // Predicated region
    $region18: #{tpu_custom_call.1} parent=1 // pred_check
      _
    $region19: #{tpu_custom_call.1} parent=1 // pred_check_branch
      %36 = sbr.rel (0) target = $region21
    $region20: #{tpu_custom_call.1} parent=1 // pred_region
      _
    $region21: #{tpu_custom_call.1} parent=1 // pred_fallthru
      _
    // Predicated region
    $region22: #{tpu_custom_call.1} parent=1 // pred_check
      _
    $region23: #{tpu_custom_call.1} parent=1 // pred_check_branch
      %38 = sbr.rel (0) target = $region25
    $region24: #{tpu_custom_call.1} parent=1 // pred_region
      %s40 = ssub.s32 2048, 2048
      %41 = vsyncadd [#allocation6], %s40
      %s42 = sshll.u32 [#allocation5], 4
      %s43 = int_to_ptr.vmem [resolvable:$true] %s42
      %48 = dma.hbm_to_vmem [thread:$0]  %s5, 2048, %s43, [#allocation6], 128, 128, 8
    $region25: #{tpu_custom_call.1} parent=1 // pred_fallthru
      _
    // Predicated region
    $region26: #{tpu_custom_call.1} parent=1 // pred_check
      _
    $region27: #{tpu_custom_call.1} parent=1 // pred_check_branch
      %50 = sbr.rel (0) target = $region29
    $region28: #{tpu_custom_call.1} parent=1 // pred_region
      _
    $region29: #{tpu_custom_call.1} parent=1 // pred_fallthru
      _
    // Predicated region
    $region30: #{tpu_custom_call.1} parent=1 // pred_check
      _
    $region31: #{tpu_custom_call.1} parent=1 // pred_check_branch
      %52 = sbr.rel (0) target = $region33
    $region32: #{tpu_custom_call.1} parent=1 // pred_region
      %s54 = ssub.s32 2048, 2048
      %55 = vsyncadd [#allocation6], %s54
      %s56 = sshll.u32 [#allocation7], 4
      %s57 = int_to_ptr.vmem [resolvable:$true] %s56
      %62 = dma.hbm_to_vmem [thread:$0]  %s7, 2048, %s57, [#allocation6], 128, 128, 8
    $region33: #{tpu_custom_call.1} parent=1 // pred_fallthru
      _
    // Predicated region
    $region34: #{tpu_custom_call.1} parent=1 // pred_check
      _
    $region35: #{tpu_custom_call.1} parent=1 // pred_check_branch
      %64 = sbr.rel (0) target = $region37
    $region36: #{tpu_custom_call.1} parent=1 // pred_region
      _
    $region37: #{tpu_custom_call.1} parent=1 // pred_fallthru
      _
    // Predicated region
    $region38: #{tpu_custom_call.1} parent=1 // pred_check
      _
    $region39: #{tpu_custom_call.1} parent=1 // pred_check_branch
      %66 = sbr.rel (0) target = $region41
    $region40: #{tpu_custom_call.1} parent=1 // pred_region
      %67 = dma.done [#allocation3], 2048
    $region41: #{tpu_custom_call.1} parent=1 // pred_fallthru
      _
    // Predicated region
    $region42: #{tpu_custom_call.1} parent=1 // pred_check
      _
    $region43: #{tpu_custom_call.1} parent=1 // pred_check_branch
      %69 = sbr.rel (0) target = $region45
    $region44: #{tpu_custom_call.1} parent=1 // pred_region
      %70 = dma.done [#allocation6], 2048
    $region45: #{tpu_custom_call.1} parent=1 // pred_fallthru
      _
    // Predicated region
    $region46: #{tpu_custom_call.1} parent=1 // pred_check
      _
    $region47: #{tpu_custom_call.1} parent=1 // pred_check_branch
      %72 = sbr.rel (0) target = $region49
    $region48: #{tpu_custom_call.1} parent=1 // pred_region
      %73 = dma.done [#allocation6], 2048
    $region49: #{tpu_custom_call.1} parent=1 // pred_fallthru
      _
    %v74 = vld [vmem:[%s0] sm:$0xff]
    %v75 = vld [vmem:[%s0 + $0x8] sm:$0xff]
    %v76 = vld [vmem:[%s1] sm:$0xff]
    %v77 = vld [vmem:[%s2] sm:$0x1]
    %v79 = vlaneseq
    %v80 = vshrl.u32 %v79, 7
    %v81 = vsub.s32 0, %v80
    %v82 = vrot.slane %v77, %v81
    %vm84 = vcmask 64512
    %v86 = vsel %vm84, %v74, 0
    %v89 = vsel %vm84, %v75, 0
    %91 = vmatprep.subr.mxu0 0.0
    %92 = vmatpush1.msra.mxu0 %v76
    %93 = vmatprep.subr.mxu0 0.0
    %94 = vmatpush1.msra.mxu0 0.0
    %95 = vmatprep.subr.mxu0 0.0
    %96 = vmatpush1.msra.mxu0 0.0
    %97 = vmatprep.subr.mxu0 0.0
    %98 = vmatpush1.msra.mxu0 0.0
    %99 = vmatprep.subr.mxu0 0.0
    %100 = vmatpush1.msra.mxu0 0.0
    %101 = vmatprep.subr.mxu0 0.0
    %102 = vmatpush1.msra.mxu0 0.0
    %103 = vmatprep.subr.mxu0 0.0
    %104 = vmatpush1.msra.mxu0 0.0
    %105 = vmatprep.subr.mxu0 0.0
    %106 = vmatpush1.msra.mxu0 0.0
    %107 = vmatprep.subr.mxu0 0.0
    %108 = vmatpush1.msra.mxu0 0.0
    %109 = vmatprep.subr.mxu0 0.0
    %110 = vmatpush1.msra.mxu0 0.0
    %111 = vmatprep.subr.mxu0 0.0
    %112 = vmatpush1.msra.mxu0 0.0
    %113 = vmatprep.subr.mxu0 0.0
    %114 = vmatpush1.msra.mxu0 0.0
    %115 = vmatprep.subr.mxu0 0.0
    %116 = vmatpush1.msra.mxu0 0.0
    %117 = vmatprep.subr.mxu0 0.0
    %118 = vmatpush1.msra.mxu0 0.0
    %119 = vmatprep.subr.mxu0 0.0
    %120 = vmatpush1.msra.mxu0 0.0
    %121 = vmatprep.subr.mxu0 0.0
    %122 = vmatpush1.msra.mxu0 0.0
    %123 = vmatprep.subr.mxu0 0.0
    %124 = vmatpush1.msra.mxu0 0.0
    %125 = vmatprep.subr.mxu0 0.0
    %126 = vmatpush1.msra.mxu0 0.0
    %127 = vmatprep.subr.mxu0 0.0
    %128 = vmatpush1.msra.mxu0 0.0
    %129 = vmatprep.subr.mxu0 0.0
    %130 = vmatpush1.msra.mxu0 0.0
    %131 = vmatprep.subr.mxu0 0.0
    %132 = vmatpush1.msra.mxu0 0.0
    %133 = vmatprep.subr.mxu0 0.0
    %134 = vmatpush1.msra.mxu0 0.0
    %135 = vmatprep.subr.mxu0 0.0
    %136 = vmatpush1.msra.mxu0 0.0
    %137 = vmatprep.subr.mxu0 0.0
    %138 = vmatpush1.msra.mxu0 0.0
    %139 = vmatprep.subr.mxu0 0.0
    %140 = vmatpush1.msra.mxu0 0.0
    %141 = vmatprep.subr.mxu0 0.0
    %142 = vmatpush1.msra.mxu0 0.0
    %143 = vmatprep.subr.mxu0 0.0
    %144 = vmatpush1.msra.mxu0 0.0
    %145 = vmatprep.subr.mxu0 0.0
    %146 = vmatpush1.msra.mxu0 0.0
    %147 = vmatprep.subr.mxu0 0.0
    %148 = vmatpush1.msra.mxu0 0.0
    %149 = vmatprep.subr.mxu0 0.0
    %150 = vmatpush1.msra.mxu0 0.0
    %151 = vmatprep.subr.mxu0 0.0
    %152 = vmatpush1.msra.mxu0 0.0
    %153 = vmatprep.subr.mxu0 0.0
    %154 = vmatpush1.msra.mxu0 0.0
    %155 = vmatprep.mubr.f32.mxu0 0.0
    %156 = vmatmul.mubr.f32.gmra.mrb[0].mxu0 %v86
    %v157 = vpop.f32.mrb[0].mxu0
    %v158 = vadd.f32 %v82, %v157
    %v159 = vpop.f32.mrb[0].mxu0
    %160 = vmatprep.mubr.f32.mxu0 0.0
    %161 = vmatmul.mubr.f32.gmra.mrb[0].mxu0 %v89
    %v162 = vpop.f32.mrb[0].mxu0
    %v163 = vadd.f32 %v82, %v162
    %v164 = vpop.f32.mrb[0].mxu0
    %165 = vdwg.mxu0
    %v166 = vmax.f32 %v158, 0.0
    %v167 = vmax.f32 %v163, 0.0
    %v168 = vld [vmem:[#allocation2] sm:$0xff]
    %v169 = vld [vmem:[#allocation2 + $0x8] sm:$0xff]
    %v170 = vld [vmem:[#allocation2 + $0x10] sm:$0xff]
    %v171 = vld [vmem:[#allocation2 + $0x18] sm:$0xff]
    %v172 = vld [vmem:[#allocation2 + $0x20] sm:$0xff]
    %v173 = vld [vmem:[#allocation2 + $0x28] sm:$0xff]
    %v174 = vld [vmem:[#allocation2 + $0x30] sm:$0xff]
    %v175 = vld [vmem:[#allocation2 + $0x38] sm:$0xff]
    %v176 = vld [vmem:[#allocation2 + $0x40] sm:$0xff]
    %v177 = vld [vmem:[#allocation2 + $0x48] sm:$0xff]
    %v178 = vld [vmem:[#allocation2 + $0x50] sm:$0xff]
    %v179 = vld [vmem:[#allocation2 + $0x58] sm:$0xff]
    %v180 = vld [vmem:[#allocation2 + $0x60] sm:$0xff]
    %v181 = vld [vmem:[#allocation2 + $0x68] sm:$0xff]
    %v182 = vld [vmem:[#allocation2 + $0x70] sm:$0xff]
    %v183 = vld [vmem:[#allocation2 + $0x78] sm:$0xff]
    %v184 = vld [vmem:[%s4] sm:$0x1]
    %v186 = vlaneseq
    %v187 = vshrl.u32 %v186, 7
    %v188 = vsub.s32 0, %v187
    %v189 = vrot.slane %v184, %v188
    %191 = vmatprep.subr.mxu0 0.0
    %192 = vmatpush1.msra.mxu0 %v168
    %193 = vmatprep.subr.mxu0 0.0
    %194 = vmatpush1.msra.mxu0 %v169
    %195 = vmatprep.subr.mxu0 0.0
    %196 = vmatpush1.msra.mxu0 %v170
    %197 = vmatprep.subr.mxu0 0.0
    %198 = vmatpush1.msra.mxu0 %v171
    %199 = vmatprep.subr.mxu0 0.0
    %200 = vmatpush1.msra.mxu0 %v172
    %201 = vmatprep.subr.mxu0 0.0
    %202 = vmatpush1.msra.mxu0 %v173
    %203 = vmatprep.subr.mxu0 0.0
    %204 = vmatpush1.msra.mxu0 %v174
    %205 = vmatprep.subr.mxu0 0.0
    %206 = vmatpush1.msra.mxu0 %v175
    %207 = vmatprep.subr.mxu0 0.0
    %208 = vmatpush1.msra.mxu0 %v176
    %209 = vmatprep.subr.mxu0 0.0
    %210 = vmatpush1.msra.mxu0 %v177
    %211 = vmatprep.subr.mxu0 0.0
    %212 = vmatpush1.msra.mxu0 %v178
    %213 = vmatprep.subr.mxu0 0.0
    %214 = vmatpush1.msra.mxu0 %v179
    %215 = vmatprep.subr.mxu0 0.0
    %216 = vmatpush1.msra.mxu0 %v180
    %217 = vmatprep.subr.mxu0 0.0
    %218 = vmatpush1.msra.mxu0 %v181
    %219 = vmatprep.subr.mxu0 0.0
    %220 = vmatpush1.msra.mxu0 %v182
    %221 = vmatprep.subr.mxu0 0.0
    %222 = vmatpush1.msra.mxu0 %v183
    %223 = vmatprep.subr.mxu0 0.0
    %224 = vmatpush1.msra.mxu0 0.0
    %225 = vmatprep.subr.mxu0 0.0
    %226 = vmatpush1.msra.mxu0 0.0
    %227 = vmatprep.subr.mxu0 0.0
    %228 = vmatpush1.msra.mxu0 0.0
    %229 = vmatprep.subr.mxu0 0.0
    %230 = vmatpush1.msra.mxu0 0.0
    %231 = vmatprep.subr.mxu0 0.0
    %232 = vmatpush1.msra.mxu0 0.0
    %233 = vmatprep.subr.mxu0 0.0
    %234 = vmatpush1.msra.mxu0 0.0
    %235 = vmatprep.subr.mxu0 0.0
    %236 = vmatpush1.msra.mxu0 0.0
    %237 = vmatprep.subr.mxu0 0.0
    %238 = vmatpush1.msra.mxu0 0.0
    %239 = vmatprep.subr.mxu0 0.0
    %240 = vmatpush1.msra.mxu0 0.0
    %241 = vmatprep.subr.mxu0 0.0
    %242 = vmatpush1.msra.mxu0 0.0
    %243 = vmatprep.subr.mxu0 0.0
    %244 = vmatpush1.msra.mxu0 0.0
    %245 = vmatprep.subr.mxu0 0.0
    %246 = vmatpush1.msra.mxu0 0.0
    %247 = vmatprep.subr.mxu0 0.0
    %248 = vmatpush1.msra.mxu0 0.0
    %249 = vmatprep.subr.mxu0 0.0
    %250 = vmatpush1.msra.mxu0 0.0
    %251 = vmatprep.subr.mxu0 0.0
    %252 = vmatpush1.msra.mxu0 0.0
    %253 = vmatprep.subr.mxu0 0.0
    %254 = vmatpush1.msra.mxu0 0.0
    %255 = vmatprep.mubr.f32.mxu0 0.0
    %256 = vmatmul.mubr.f32.gmra.mrb[0].mxu0 %v166
    %v257 = vpop.f32.mrb[0].mxu0
    %v258 = vadd.f32 %v189, %v257
    %v259 = vpop.f32.mrb[0].mxu0
    %260 = vmatprep.mubr.f32.mxu0 0.0
    %261 = vmatmul.mubr.f32.gmra.mrb[0].mxu0 %v167
    %v262 = vpop.f32.mrb[0].mxu0
    %v263 = vadd.f32 %v189, %v262
    %v264 = vpop.f32.mrb[0].mxu0
    %265 = vdwg.mxu0
    %v266 = vmax.f32 %v258, 0.0
    %v267 = vmax.f32 %v263, 0.0
    %v268 = vld [vmem:[#allocation5] sm:$0xff]
    %v269 = vld [vmem:[#allocation5 + $0x8] sm:$0xff]
    %v270 = vld [vmem:[#allocation5 + $0x10] sm:$0xff]
    %v271 = vld [vmem:[#allocation5 + $0x18] sm:$0xff]
    %v272 = vld [vmem:[#allocation5 + $0x20] sm:$0xff]
    %v273 = vld [vmem:[#allocation5 + $0x28] sm:$0xff]
    %v274 = vld [vmem:[#allocation5 + $0x30] sm:$0xff]
    %v275 = vld [vmem:[#allocation5 + $0x38] sm:$0xff]
    %v276 = vld [vmem:[#allocation5 + $0x40] sm:$0xff]
    %v277 = vld [vmem:[#allocation5 + $0x48] sm:$0xff]
    %v278 = vld [vmem:[#allocation5 + $0x50] sm:$0xff]
    %v279 = vld [vmem:[#allocation5 + $0x58] sm:$0xff]
    %v280 = vld [vmem:[#allocation5 + $0x60] sm:$0xff]
    %v281 = vld [vmem:[#allocation5 + $0x68] sm:$0xff]
    %v282 = vld [vmem:[#allocation5 + $0x70] sm:$0xff]
    %v283 = vld [vmem:[#allocation5 + $0x78] sm:$0xff]
    %v284 = vld [vmem:[%s6] sm:$0x1]
    %v286 = vlaneseq
    %v287 = vshrl.u32 %v286, 7
    %v288 = vsub.s32 0, %v287
    %v289 = vrot.slane %v284, %v288
    %291 = vmatprep.subr.mxu0 0.0
    %292 = vmatpush1.msra.mxu0 %v268
    %293 = vmatprep.subr.mxu0 0.0
    %294 = vmatpush1.msra.mxu0 %v269
    %295 = vmatprep.subr.mxu0 0.0
    %296 = vmatpush1.msra.mxu0 %v270
    %297 = vmatprep.subr.mxu0 0.0
    %298 = vmatpush1.msra.mxu0 %v271
    %299 = vmatprep.subr.mxu0 0.0
    %300 = vmatpush1.msra.mxu0 %v272
    %301 = vmatprep.subr.mxu0 0.0
    %302 = vmatpush1.msra.mxu0 %v273
    %303 = vmatprep.subr.mxu0 0.0
    %304 = vmatpush1.msra.mxu0 %v274
    %305 = vmatprep.subr.mxu0 0.0
    %306 = vmatpush1.msra.mxu0 %v275
    %307 = vmatprep.subr.mxu0 0.0
    %308 = vmatpush1.msra.mxu0 %v276
    %309 = vmatprep.subr.mxu0 0.0
    %310 = vmatpush1.msra.mxu0 %v277
    %311 = vmatprep.subr.mxu0 0.0
    %312 = vmatpush1.msra.mxu0 %v278
    %313 = vmatprep.subr.mxu0 0.0
    %314 = vmatpush1.msra.mxu0 %v279
    %315 = vmatprep.subr.mxu0 0.0
    %316 = vmatpush1.msra.mxu0 %v280
    %317 = vmatprep.subr.mxu0 0.0
    %318 = vmatpush1.msra.mxu0 %v281
    %319 = vmatprep.subr.mxu0 0.0
    %320 = vmatpush1.msra.mxu0 %v282
    %321 = vmatprep.subr.mxu0 0.0
    %322 = vmatpush1.msra.mxu0 %v283
    %323 = vmatprep.subr.mxu0 0.0
    %324 = vmatpush1.msra.mxu0 0.0
    %325 = vmatprep.subr.mxu0 0.0
    %326 = vmatpush1.msra.mxu0 0.0
    %327 = vmatprep.subr.mxu0 0.0
    %328 = vmatpush1.msra.mxu0 0.0
    %329 = vmatprep.subr.mxu0 0.0
    %330 = vmatpush1.msra.mxu0 0.0
    %331 = vmatprep.subr.mxu0 0.0
    %332 = vmatpush1.msra.mxu0 0.0
    %333 = vmatprep.subr.mxu0 0.0
    %334 = vmatpush1.msra.mxu0 0.0
    %335 = vmatprep.subr.mxu0 0.0
    %336 = vmatpush1.msra.mxu0 0.0
    %337 = vmatprep.subr.mxu0 0.0
    %338 = vmatpush1.msra.mxu0 0.0
    %339 = vmatprep.subr.mxu0 0.0
    %340 = vmatpush1.msra.mxu0 0.0
    %341 = vmatprep.subr.mxu0 0.0
    %342 = vmatpush1.msra.mxu0 0.0
    %343 = vmatprep.subr.mxu0 0.0
    %344 = vmatpush1.msra.mxu0 0.0
    %345 = vmatprep.subr.mxu0 0.0
    %346 = vmatpush1.msra.mxu0 0.0
    %347 = vmatprep.subr.mxu0 0.0
    %348 = vmatpush1.msra.mxu0 0.0
    %349 = vmatprep.subr.mxu0 0.0
    %350 = vmatpush1.msra.mxu0 0.0
    %351 = vmatprep.subr.mxu0 0.0
    %352 = vmatpush1.msra.mxu0 0.0
    %353 = vmatprep.subr.mxu0 0.0
    %354 = vmatpush1.msra.mxu0 0.0
    %355 = vmatprep.mubr.f32.mxu0 0.0
    %356 = vmatmul.mubr.f32.gmra.mrb[0].mxu0 %v266
    %v357 = vpop.f32.mrb[0].mxu0
    %v358 = vadd.f32 %v289, %v357
    %v359 = vpop.f32.mrb[0].mxu0
    %360 = vmatprep.mubr.f32.mxu0 0.0
    %361 = vmatmul.mubr.f32.gmra.mrb[0].mxu0 %v267
    %v362 = vpop.f32.mrb[0].mxu0
    %v363 = vadd.f32 %v289, %v362
    %v364 = vpop.f32.mrb[0].mxu0
    %365 = vdwg.mxu0
    %v366 = vmax.f32 %v358, 0.0
    %v367 = vmax.f32 %v363, 0.0
    %v368 = vld [vmem:[#allocation7] sm:$0xff]
    %v369 = vld [vmem:[#allocation7 + $0x8] sm:$0xff]
    %v370 = vld [vmem:[#allocation7 + $0x10] sm:$0xff]
    %v371 = vld [vmem:[#allocation7 + $0x18] sm:$0xff]
    %v372 = vld [vmem:[#allocation7 + $0x20] sm:$0xff]
    %v373 = vld [vmem:[#allocation7 + $0x28] sm:$0xff]
    %v374 = vld [vmem:[#allocation7 + $0x30] sm:$0xff]
    %v375 = vld [vmem:[#allocation7 + $0x38] sm:$0xff]
    %v376 = vld [vmem:[#allocation7 + $0x40] sm:$0xff]
    %v377 = vld [vmem:[#allocation7 + $0x48] sm:$0xff]
    %v378 = vld [vmem:[#allocation7 + $0x50] sm:$0xff]
    %v379 = vld [vmem:[#allocation7 + $0x58] sm:$0xff]
    %v380 = vld [vmem:[#allocation7 + $0x60] sm:$0xff]
    %v381 = vld [vmem:[#allocation7 + $0x68] sm:$0xff]
    %v382 = vld [vmem:[#allocation7 + $0x70] sm:$0xff]
    %v383 = vld [vmem:[#allocation7 + $0x78] sm:$0xff]
    %v384 = vld [vmem:[%s8] sm:$0x1]
    %v386 = vlaneseq
    %v387 = vshrl.u32 %v386, 7
    %v388 = vsub.s32 0, %v387
    %v389 = vrot.slane %v384, %v388
    %391 = vmatprep.subr.mxu0 0.0
    %392 = vmatpush1.msra.mxu0 %v368
    %393 = vmatprep.subr.mxu0 0.0
    %394 = vmatpush1.msra.mxu0 %v369
    %395 = vmatprep.subr.mxu0 0.0
    %396 = vmatpush1.msra.mxu0 %v370
    %397 = vmatprep.subr.mxu0 0.0
    %398 = vmatpush1.msra.mxu0 %v371
    %399 = vmatprep.subr.mxu0 0.0
    %400 = vmatpush1.msra.mxu0 %v372
    %401 = vmatprep.subr.mxu0 0.0
    %402 = vmatpush1.msra.mxu0 %v373
    %403 = vmatprep.subr.mxu0 0.0
    %404 = vmatpush1.msra.mxu0 %v374
    %405 = vmatprep.subr.mxu0 0.0
    %406 = vmatpush1.msra.mxu0 %v375
    %407 = vmatprep.subr.mxu0 0.0
    %408 = vmatpush1.msra.mxu0 %v376
    %409 = vmatprep.subr.mxu0 0.0
    %410 = vmatpush1.msra.mxu0 %v377
    %411 = vmatprep.subr.mxu0 0.0
    %412 = vmatpush1.msra.mxu0 %v378
    %413 = vmatprep.subr.mxu0 0.0
    %414 = vmatpush1.msra.mxu0 %v379
    %415 = vmatprep.subr.mxu0 0.0
    %416 = vmatpush1.msra.mxu0 %v380
    %417 = vmatprep.subr.mxu0 0.0
    %418 = vmatpush1.msra.mxu0 %v381
    %419 = vmatprep.subr.mxu0 0.0
    %420 = vmatpush1.msra.mxu0 %v382
    %421 = vmatprep.subr.mxu0 0.0
    %422 = vmatpush1.msra.mxu0 %v383
    %423 = vmatprep.subr.mxu0 0.0
    %424 = vmatpush1.msra.mxu0 0.0
    %425 = vmatprep.subr.mxu0 0.0
    %426 = vmatpush1.msra.mxu0 0.0
    %427 = vmatprep.subr.mxu0 0.0
    %428 = vmatpush1.msra.mxu0 0.0
    %429 = vmatprep.subr.mxu0 0.0
    %430 = vmatpush1.msra.mxu0 0.0
    %431 = vmatprep.subr.mxu0 0.0
    %432 = vmatpush1.msra.mxu0 0.0
    %433 = vmatprep.subr.mxu0 0.0
    %434 = vmatpush1.msra.mxu0 0.0
    %435 = vmatprep.subr.mxu0 0.0
    %436 = vmatpush1.msra.mxu0 0.0
    %437 = vmatprep.subr.mxu0 0.0
    %438 = vmatpush1.msra.mxu0 0.0
    %439 = vmatprep.subr.mxu0 0.0
    %440 = vmatpush1.msra.mxu0 0.0
    %441 = vmatprep.subr.mxu0 0.0
    %442 = vmatpush1.msra.mxu0 0.0
    %443 = vmatprep.subr.mxu0 0.0
    %444 = vmatpush1.msra.mxu0 0.0
    %445 = vmatprep.subr.mxu0 0.0
    %446 = vmatpush1.msra.mxu0 0.0
    %447 = vmatprep.subr.mxu0 0.0
    %448 = vmatpush1.msra.mxu0 0.0
    %449 = vmatprep.subr.mxu0 0.0
    %450 = vmatpush1.msra.mxu0 0.0
    %451 = vmatprep.subr.mxu0 0.0
    %452 = vmatpush1.msra.mxu0 0.0
    %453 = vmatprep.subr.mxu0 0.0
    %454 = vmatpush1.msra.mxu0 0.0
    %455 = vmatprep.mubr.f32.mxu0 0.0
    %456 = vmatmul.mubr.f32.gmra.mrb[0].mxu0 %v366
    %v457 = vpop.f32.mrb[0].mxu0
    %v458 = vadd.f32 %v389, %v457
    %v459 = vpop.f32.mrb[0].mxu0
    %460 = vmatprep.mubr.f32.mxu0 0.0
    %461 = vmatmul.mubr.f32.gmra.mrb[0].mxu0 %v367
    %v462 = vpop.f32.mrb[0].mxu0
    %v463 = vadd.f32 %v389, %v462
    %v464 = vpop.f32.mrb[0].mxu0
    %465 = vdwg.mxu0
    %v466 = vmul.f32 %v458, 0.5
    %v467 = vmul.f32 %v463, 0.5
    %v468 = vtanh.pop %v466
    %v469 = vtanh.pop %v467
    %v470 = vadd.f32 %v468, 1.0
    %v471 = vadd.f32 %v469, 1.0
    %v472 = vmul.f32 %v470, 0.5
    %v473 = vmul.f32 %v471, 0.5
    %474 = vst [vmem:[#allocation8] sm:$0xff] %v472
    %475 = vst [vmem:[#allocation8 + $0x8] sm:$0xff] %v473
    // Predicated region
    $region50: #{tpu_custom_call.1} parent=1 // pred_check
      _
    $region51: #{tpu_custom_call.1} parent=1 // pred_check_branch
      %477 = sbr.rel (0) target = $region53
    $region52: #{tpu_custom_call.1} parent=1 // pred_region
      %s479 = ssub.s32 256, 256
      %480 = vsyncadd [#allocation4], %s479
      %s481 = sshll.u32 [#allocation8], 4
      %s482 = int_to_ptr.vmem [resolvable:$true] %s481
      %487 = dma.vmem_to_hbm [thread:$0]  %s482, 256, %s9, [#allocation4], 128, 128, 8
    $region53: #{tpu_custom_call.1} parent=1 // pred_fallthru
      _
    // Predicated region
    $region54: #{tpu_custom_call.1} parent=1 // pred_check
      _
    $region55: #{tpu_custom_call.1} parent=1 // pred_check_branch
      %489 = sbr.rel (0) target = $region57
    $region56: #{tpu_custom_call.1} parent=1 // pred_region
      %490 = dma.done [#allocation4], 256
    $region57: #{tpu_custom_call.1} parent=1 // pred_fallthru
      _
    %491 = vsyncpa [#allocation3], 1
    %492 = vsyncpa [#allocation6], 1
    %493 = vsyncpa [#allocation4], 1

// kernel: tpu_custom_call.1
$region0: #{tpu_custom_call.1}
  #allocation0 [shape = 'u32[]', space=smem, size = 0x4, offset = 0x4, fixed_abs, tag = 'smem constant byte address 0x4 - core index']
  #allocation1 [shape = 'u32[144,128]{1,0:T(1,128)}', space=vmem, size = 0x12000, scoped, tag = 'internal scratch']
  %s0 = inlined_call_operand.vmem [shape: f32[16,8], index: 0, kind: input, shape index: {}]
  %s1 = inlined_call_operand.vmem [shape: f32[8,128], index: 1, kind: input, shape index: {}]
  %s2 = inlined_call_operand.vmem [shape: f32[1,128], index: 2, kind: input, shape index: {}]
  %s3 = inlined_call_operand.hbm [shape: f32[128,128], index: 3, kind: input, shape index: {}]
  %s4 = inlined_call_operand.vmem [shape: f32[1,128], index: 4, kind: input, shape index: {}]
  %s5 = inlined_call_operand.hbm [shape: f32[128,128], index: 5, kind: input, shape index: {}]
  %s6 = inlined_call_operand.vmem [shape: f32[1,128], index: 6, kind: input, shape index: {}]
  %s7 = inlined_call_operand.hbm [shape: f32[128,128], index: 7, kind: input, shape index: {}]
  %s8 = inlined_call_operand.vmem [shape: f32[1,128], index: 8, kind: input, shape index: {}]
  %s9 = inlined_call_operand.hbm [shape: f32[16,128], index: 9, kind: output, shape index: {}]
  %s10 = sld [smem:[#allocation0]]
  $region58: #{tpu_custom_call.1} parent=0
    _
  %s12 = ssub.s32 1, %s10
  %s13 = scalar_select 0, %s12, %s10
  $region1: #{tpu_custom_call.1} parent=0
    #allocation2 [shape = 'u8[65536]{0}', space=vmem, size = 0x10000, scoped, tag = 'input window, operand 3, single buffered']
    #allocation3 [shape = 's32[1]{0}', space=sflag, size = 0x4, scoped, tag = 'scoped memory for tpu_custom_call.1']
    #allocation4 [shape = 's32[1]{0}', space=sflag, size = 0x4, scoped, tag = 'scoped memory for tpu_custom_call.1']
    #allocation5 [shape = 'u8[65536]{0}', space=vmem, size = 0x10000, scoped, tag = 'input window, operand 5, single buffered']
    #allocation6 [shape = 's32[1]{0}', space=sflag, size = 0x4, scoped, tag = 'scoped memory for tpu_custom_call.1']
    #allocation7 [shape = 'u8[65536]{0}', space=vmem, size = 0x10000, scoped, tag = 'input window, operand 7, single buffered']
    #allocation8 [shape = 'u8[8192]{0}', space=vmem, size = 0x2000, scoped, tag = 'output window, operand 0, single buffered']
    %14 = vsyncpa [#allocation3], 0
    %15 = vsyncpa [#allocation6], 0
    %16 = vsyncpa [#allocation4], 0
    // Predicated region
    $region2: #{tpu_custom_call.1} parent=1 // pred_check
      _
    $region3: #{tpu_custom_call.1} parent=1 // pred_check_branch
      %18 = sbr.rel (0) target = $region5
    $region4: #{tpu_custom_call.1} parent=1 // pred_region
      _
    $region5: #{tpu_custom_call.1} parent=1 // pred_fallthru
      _
    // Predicated region
    $region6: #{tpu_custom_call.1} parent=1 // pred_check
      _
    $region7: #{tpu_custom_call.1} parent=1 // pred_check_branch
      %20 = sbr.rel (0) target = $region9
    $region8: #{tpu_custom_call.1} parent=1 // pred_region
      _
    $region9: #{tpu_custom_call.1} parent=1 // pred_fallthru
      _
    // Predicated region
    $region10: #{tpu_custom_call.1} parent=1 // pred_check
      _
    $region11: #{tpu_custom_call.1} parent=1 // pred_check_branch
      %22 = sbr.rel (0) target = $region13
    $region12: #{tpu_custom_call.1} parent=1 // pred_region
      _
    $region13: #{tpu_custom_call.1} parent=1 // pred_fallthru
      _
    // Predicated region
    $region14: #{tpu_custom_call.1} parent=1 // pred_check
      _
    $region15: #{tpu_custom_call.1} parent=1 // pred_check_branch
      %24 = sbr.rel (0) target = $region17
    $region16: #{tpu_custom_call.1} parent=1 // pred_region
      %s26 = ssub.s32 2048, 2048
      %27 = vsyncadd [#allocation3], %s26
      %s28 = sshll.u32 [#allocation2], 4
      %s29 = int_to_ptr.vmem [resolvable:$true] %s28
      %34 = dma.hbm_to_vmem [thread:$0]  %s3, 2048, %s29, [#allocation3], 128, 128, 8
    $region17: #{tpu_custom_call.1} parent=1 // pred_fallthru
      _
    // Predicated region
    $region18: #{tpu_custom_call.1} parent=1 // pred_check
      _
    $region19: #{tpu_custom_call.1} parent=1 // pred_check_branch
      %36 = sbr.rel (0) target = $region21
    $region20: #{tpu_custom_call.1} parent=1 // pred_region
      _
    $region21: #{tpu_custom_call.1} parent=1 // pred_fallthru
      _
    // Predicated region
    $region22: #{tpu_custom_call.1} parent=1 // pred_check
      _
    $region23: #{tpu_custom_call.1} parent=1 // pred_check_branch
      %38 = sbr.rel (0) target = $region25
    $region24: #{tpu_custom_call.1} parent=1 // pred_region
      %s40 = ssub.s32 2048, 2048
      %41 = vsyncadd [#allocation6], %s40
      %s42 = sshll.u32 [#allocation5], 4
      %s43 = int_to_ptr.vmem [resolvable:$true] %s42
      %48 = dma.hbm_to_vmem [thread:$0]  %s5, 2048, %s43, [#allocation6], 128, 128, 8
    $region25: #{tpu_custom_call.1} parent=1 // pred_fallthru
      _
    // Predicated region
    $region26: #{tpu_custom_call.1} parent=1 // pred_check
      _
    $region27: #{tpu_custom_call.1} parent=1 // pred_check_branch
      %50 = sbr.rel (0) target = $region29
    $region28: #{tpu_custom_call.1} parent=1 // pred_region
      _
    $region29: #{tpu_custom_call.1} parent=1 // pred_fallthru
      _
    // Predicated region
    $region30: #{tpu_custom_call.1} parent=1 // pred_check
      _
    $region31: #{tpu_custom_call.1} parent=1 // pred_check_branch
      %52 = sbr.rel (0) target = $region33
    $region32: #{tpu_custom_call.1} parent=1 // pred_region
      %s54 = ssub.s32 2048, 2048
      %55 = vsyncadd [#allocation6], %s54
      %s56 = sshll.u32 [#allocation7], 4
      %s57 = int_to_ptr.vmem [resolvable:$true] %s56
      %62 = dma.hbm_to_vmem [thread:$0]  %s7, 2048, %s57, [#allocation6], 128, 128, 8
    $region33: #{tpu_custom_call.1} parent=1 // pred_fallthru
      _
    // Predicated region
    $region34: #{tpu_custom_call.1} parent=1 // pred_check
      _
    $region35: #{tpu_custom_call.1} parent=1 // pred_check_branch
      %64 = sbr.rel (0) target = $region37
    $region36: #{tpu_custom_call.1} parent=1 // pred_region
      _
    $region37: #{tpu_custom_call.1} parent=1 // pred_fallthru
      _
    // Predicated region
    $region38: #{tpu_custom_call.1} parent=1 // pred_check
      _
    $region39: #{tpu_custom_call.1} parent=1 // pred_check_branch
      %66 = sbr.rel (0) target = $region41
    $region40: #{tpu_custom_call.1} parent=1 // pred_region
      %67 = dma.done [#allocation3], 2048
    $region41: #{tpu_custom_call.1} parent=1 // pred_fallthru
      _
    // Predicated region
    $region42: #{tpu_custom_call.1} parent=1 // pred_check
      _
    $region43: #{tpu_custom_call.1} parent=1 // pred_check_branch
      %69 = sbr.rel (0) target = $region45
    $region44: #{tpu_custom_call.1} parent=1 // pred_region
      %70 = dma.done [#allocation6], 2048
    $region45: #{tpu_custom_call.1} parent=1 // pred_fallthru
      _
    // Predicated region
    $region46: #{tpu_custom_call.1} parent=1 // pred_check
      _
    $region47: #{tpu_custom_call.1} parent=1 // pred_check_branch
      %72 = sbr.rel (0) target = $region49
    $region48: #{tpu_custom_call.1} parent=1 // pred_region
      %73 = dma.done [#allocation6], 2048
    $region49: #{tpu_custom_call.1} parent=1 // pred_fallthru
      _
    %v74 = vld [vmem:[%s0] sm:$0xff]
    %v75 = vld [vmem:[%s0 + $0x8] sm:$0xff]
    %v76 = vld [vmem:[%s1] sm:$0xff]
    %v77 = vld [vmem:[%s2] sm:$0x1]
    %v79 = vlaneseq
    %v80 = vshrl.u32 %v79, 7
    %v81 = vsub.s32 0, %v80
    %v82 = vrot.slane %v77, %v81
    %vm84 = vcmask 64512
    %v86 = vsel %vm84, %v74, 0
    %v89 = vsel %vm84, %v75, 0
    %91 = vmatprep.subr.mxu0 0.0
    %92 = vmatpush1.msra.mxu0 %v76
    %93 = vmatprep.subr.mxu0 0.0
    %94 = vmatpush1.msra.mxu0 0.0
    %95 = vmatprep.subr.mxu0 0.0
    %96 = vmatpush1.msra.mxu0 0.0
    %97 = vmatprep.subr.mxu0 0.0
    %98 = vmatpush1.msra.mxu0 0.0
    %99 = vmatprep.subr.mxu0 0.0
    %100 = vmatpush1.msra.mxu0 0.0
    %101 = vmatprep.subr.mxu0 0.0
    %102 = vmatpush1.msra.mxu0 0.0
    %103 = vmatprep.subr.mxu0 0.0
    %104 = vmatpush1.msra.mxu0 0.0
    %105 = vmatprep.subr.mxu0 0.0
    %106 = vmatpush1.msra.mxu0 0.0
    %107 = vmatprep.subr.mxu0 0.0
    %108 = vmatpush1.msra.mxu0 0.0
    %109 = vmatprep.subr.mxu0 0.0
    %110 = vmatpush1.msra.mxu0 0.0
    %111 = vmatprep.subr.mxu0 0.0
    %112 = vmatpush1.msra.mxu0 0.0
    %113 = vmatprep.subr.mxu0 0.0
    %114 = vmatpush1.msra.mxu0 0.0
    %115 = vmatprep.subr.mxu0 0.0
    %116 = vmatpush1.msra.mxu0 0.0
    %117 = vmatprep.subr.mxu0 0.0
    %118 = vmatpush1.msra.mxu0 0.0
    %119 = vmatprep.subr.mxu0 0.0
    %120 = vmatpush1.msra.mxu0 0.0
    %121 = vmatprep.subr.mxu0 0.0
    %122 = vmatpush1.msra.mxu0 0.0
    %123 = vmatprep.subr.mxu0 0.0
    %124 = vmatpush1.msra.mxu0 0.0
    %125 = vmatprep.subr.mxu0 0.0
    %126 = vmatpush1.msra.mxu0 0.0
    %127 = vmatprep.subr.mxu0 0.0
    %128 = vmatpush1.msra.mxu0 0.0
    %129 = vmatprep.subr.mxu0 0.0
    %130 = vmatpush1.msra.mxu0 0.0
    %131 = vmatprep.subr.mxu0 0.0
    %132 = vmatpush1.msra.mxu0 0.0
    %133 = vmatprep.subr.mxu0 0.0
    %134 = vmatpush1.msra.mxu0 0.0
    %135 = vmatprep.subr.mxu0 0.0
    %136 = vmatpush1.msra.mxu0 0.0
    %137 = vmatprep.subr.mxu0 0.0
    %138 = vmatpush1.msra.mxu0 0.0
    %139 = vmatprep.subr.mxu0 0.0
    %140 = vmatpush1.msra.mxu0 0.0
    %141 = vmatprep.subr.mxu0 0.0
    %142 = vmatpush1.msra.mxu0 0.0
    %143 = vmatprep.subr.mxu0 0.0
    %144 = vmatpush1.msra.mxu0 0.0
    %145 = vmatprep.subr.mxu0 0.0
    %146 = vmatpush1.msra.mxu0 0.0
    %147 = vmatprep.subr.mxu0 0.0
    %148 = vmatpush1.msra.mxu0 0.0
    %149 = vmatprep.subr.mxu0 0.0
    %150 = vmatpush1.msra.mxu0 0.0
    %151 = vmatprep.subr.mxu0 0.0
    %152 = vmatpush1.msra.mxu0 0.0
    %153 = vmatprep.subr.mxu0 0.0
    %154 = vmatpush1.msra.mxu0 0.0
    %155 = vmatprep.mubr.f32.mxu0 0.0
    %156 = vmatmul.mubr.f32.gmra.mrb[0].mxu0 %v86
    %v157 = vpop.f32.mrb[0].mxu0
    %v158 = vadd.f32 %v82, %v157
    %v159 = vpop.f32.mrb[0].mxu0
    %160 = vmatprep.mubr.f32.mxu0 0.0
    %161 = vmatmul.mubr.f32.gmra.mrb[0].mxu0 %v89
    %v162 = vpop.f32.mrb[0].mxu0
    %v163 = vadd.f32 %v82, %v162
    %v164 = vpop.f32.mrb[0].mxu0
    %165 = vdwg.mxu0
    %v166 = vmax.f32 %v158, 0.0
    %v167 = vmax.f32 %v163, 0.0
    %v168 = vld [vmem:[#allocation2] sm:$0xff]
    %v169 = vld [vmem:[#allocation2 + $0x8] sm:$0xff]
    %v170 = vld [vmem:[#allocation2 + $0x10] sm:$0xff]
    %v171 = vld [vmem:[#allocation2 + $0x18] sm:$0xff]
    %v172 = vld [vmem:[#allocation2 + $0x20] sm:$0xff]
    %v173 = vld [vmem:[#allocation2 + $0x28] sm:$0xff]
    %v174 = vld [vmem:[#allocation2 + $0x30] sm:$0xff]
    %v175 = vld [vmem:[#allocation2 + $0x38] sm:$0xff]
    %v176 = vld [vmem:[#allocation2 + $0x40] sm:$0xff]
    %v177 = vld [vmem:[#allocation2 + $0x48] sm:$0xff]
    %v178 = vld [vmem:[#allocation2 + $0x50] sm:$0xff]
    %v179 = vld [vmem:[#allocation2 + $0x58] sm:$0xff]
    %v180 = vld [vmem:[#allocation2 + $0x60] sm:$0xff]
    %v181 = vld [vmem:[#allocation2 + $0x68] sm:$0xff]
    %v182 = vld [vmem:[#allocation2 + $0x70] sm:$0xff]
    %v183 = vld [vmem:[#allocation2 + $0x78] sm:$0xff]
    %v184 = vld [vmem:[%s4] sm:$0x1]
    %v186 = vlaneseq
    %v187 = vshrl.u32 %v186, 7
    %v188 = vsub.s32 0, %v187
    %v189 = vrot.slane %v184, %v188
    %191 = vmatprep.subr.mxu0 0.0
    %192 = vmatpush1.msra.mxu0 %v168
    %193 = vmatprep.subr.mxu0 0.0
    %194 = vmatpush1.msra.mxu0 %v169
    %195 = vmatprep.subr.mxu0 0.0
    %196 = vmatpush1.msra.mxu0 %v170
    %197 = vmatprep.subr.mxu0 0.0
    %198 = vmatpush1.msra.mxu0 %v171
    %199 = vmatprep.subr.mxu0 0.0
    %200 = vmatpush1.msra.mxu0 %v172
    %201 = vmatprep.subr.mxu0 0.0
    %202 = vmatpush1.msra.mxu0 %v173
    %203 = vmatprep.subr.mxu0 0.0
    %204 = vmatpush1.msra.mxu0 %v174
    %205 = vmatprep.subr.mxu0 0.0
    %206 = vmatpush1.msra.mxu0 %v175
    %207 = vmatprep.subr.mxu0 0.0
    %208 = vmatpush1.msra.mxu0 %v176
    %209 = vmatprep.subr.mxu0 0.0
    %210 = vmatpush1.msra.mxu0 %v177
    %211 = vmatprep.subr.mxu0 0.0
    %212 = vmatpush1.msra.mxu0 %v178
    %213 = vmatprep.subr.mxu0 0.0
    %214 = vmatpush1.msra.mxu0 %v179
    %215 = vmatprep.subr.mxu0 0.0
    %216 = vmatpush1.msra.mxu0 %v180
    %217 = vmatprep.subr.mxu0 0.0
    %218 = vmatpush1.msra.mxu0 %v181
    %219 = vmatprep.subr.mxu0 0.0
    %220 = vmatpush1.msra.mxu0 %v182
    %221 = vmatprep.subr.mxu0 0.0
    %222 = vmatpush1.msra.mxu0 %v183
    %223 = vmatprep.subr.mxu0 0.0
    %224 = vmatpush1.msra.mxu0 0.0
    %225 = vmatprep.subr.mxu0 0.0
    %226 = vmatpush1.msra.mxu0 0.0
    %227 = vmatprep.subr.mxu0 0.0
    %228 = vmatpush1.msra.mxu0 0.0
    %229 = vmatprep.subr.mxu0 0.0
    %230 = vmatpush1.msra.mxu0 0.0
    %231 = vmatprep.subr.mxu0 0.0
    %232 = vmatpush1.msra.mxu0 0.0
    %233 = vmatprep.subr.mxu0 0.0
    %234 = vmatpush1.msra.mxu0 0.0
    %235 = vmatprep.subr.mxu0 0.0
    %236 = vmatpush1.msra.mxu0 0.0
    %237 = vmatprep.subr.mxu0 0.0
    %238 = vmatpush1.msra.mxu0 0.0
    %239 = vmatprep.subr.mxu0 0.0
    %240 = vmatpush1.msra.mxu0 0.0
    %241 = vmatprep.subr.mxu0 0.0
    %242 = vmatpush1.msra.mxu0 0.0
    %243 = vmatprep.subr.mxu0 0.0
    %244 = vmatpush1.msra.mxu0 0.0
    %245 = vmatprep.subr.mxu0 0.0
    %246 = vmatpush1.msra.mxu0 0.0
    %247 = vmatprep.subr.mxu0 0.0
    %248 = vmatpush1.msra.mxu0 0.0
    %249 = vmatprep.subr.mxu0 0.0
    %250 = vmatpush1.msra.mxu0 0.0
    %251 = vmatprep.subr.mxu0 0.0
    %252 = vmatpush1.msra.mxu0 0.0
    %253 = vmatprep.subr.mxu0 0.0
    %254 = vmatpush1.msra.mxu0 0.0
    %255 = vmatprep.mubr.f32.mxu0 0.0
    %256 = vmatmul.mubr.f32.gmra.mrb[0].mxu0 %v166
    %v257 = vpop.f32.mrb[0].mxu0
    %v258 = vadd.f32 %v189, %v257
    %v259 = vpop.f32.mrb[0].mxu0
    %260 = vmatprep.mubr.f32.mxu0 0.0
    %261 = vmatmul.mubr.f32.gmra.mrb[0].mxu0 %v167
    %v262 = vpop.f32.mrb[0].mxu0
    %v263 = vadd.f32 %v189, %v262
    %v264 = vpop.f32.mrb[0].mxu0
    %265 = vdwg.mxu0
    %v266 = vmax.f32 %v258, 0.0
    %v267 = vmax.f32 %v263, 0.0
    %v268 = vld [vmem:[#allocation5] sm:$0xff]
    %v269 = vld [vmem:[#allocation5 + $0x8] sm:$0xff]
    %v270 = vld [vmem:[#allocation5 + $0x10] sm:$0xff]
    %v271 = vld [vmem:[#allocation5 + $0x18] sm:$0xff]
    %v272 = vld [vmem:[#allocation5 + $0x20] sm:$0xff]
    %v273 = vld [vmem:[#allocation5 + $0x28] sm:$0xff]
    %v274 = vld [vmem:[#allocation5 + $0x30] sm:$0xff]
    %v275 = vld [vmem:[#allocation5 + $0x38] sm:$0xff]
    %v276 = vld [vmem:[#allocation5 + $0x40] sm:$0xff]
    %v277 = vld [vmem:[#allocation5 + $0x48] sm:$0xff]
    %v278 = vld [vmem:[#allocation5 + $0x50] sm:$0xff]
    %v279 = vld [vmem:[#allocation5 + $0x58] sm:$0xff]
    %v280 = vld [vmem:[#allocation5 + $0x60] sm:$0xff]
    %v281 = vld [vmem:[#allocation5 + $0x68] sm:$0xff]
    %v282 = vld [vmem:[#allocation5 + $0x70] sm:$0xff]
    %v283 = vld [vmem:[#allocation5 + $0x78] sm:$0xff]
    %v284 = vld [vmem:[%s6] sm:$0x1]
    %v286 = vlaneseq
    %v287 = vshrl.u32 %v286, 7
    %v288 = vsub.s32 0, %v287
    %v289 = vrot.slane %v284, %v288
    %291 = vmatprep.subr.mxu0 0.0
    %292 = vmatpush1.msra.mxu0 %v268
    %293 = vmatprep.subr.mxu0 0.0
    %294 = vmatpush1.msra.mxu0 %v269
    %295 = vmatprep.subr.mxu0 0.0
    %296 = vmatpush1.msra.mxu0 %v270
    %297 = vmatprep.subr.mxu0 0.0
    %298 = vmatpush1.msra.mxu0 %v271
    %299 = vmatprep.subr.mxu0 0.0
    %300 = vmatpush1.msra.mxu0 %v272
    %301 = vmatprep.subr.mxu0 0.0
    %302 = vmatpush1.msra.mxu0 %v273
    %303 = vmatprep.subr.mxu0 0.0
    %304 = vmatpush1.msra.mxu0 %v274
    %305 = vmatprep.subr.mxu0 0.0
    %306 = vmatpush1.msra.mxu0 %v275
    %307 = vmatprep.subr.mxu0 0.0
    %308 = vmatpush1.msra.mxu0 %v276
    %309 = vmatprep.subr.mxu0 0.0
    %310 = vmatpush1.msra.mxu0 %v277
    %311 = vmatprep.subr.mxu0 0.0
    %312 = vmatpush1.msra.mxu0 %v278
    %313 = vmatprep.subr.mxu0 0.0
    %314 = vmatpush1.msra.mxu0 %v279
    %315 = vmatprep.subr.mxu0 0.0
    %316 = vmatpush1.msra.mxu0 %v280
    %317 = vmatprep.subr.mxu0 0.0
    %318 = vmatpush1.msra.mxu0 %v281
    %319 = vmatprep.subr.mxu0 0.0
    %320 = vmatpush1.msra.mxu0 %v282
    %321 = vmatprep.subr.mxu0 0.0
    %322 = vmatpush1.msra.mxu0 %v283
    %323 = vmatprep.subr.mxu0 0.0
    %324 = vmatpush1.msra.mxu0 0.0
    %325 = vmatprep.subr.mxu0 0.0
    %326 = vmatpush1.msra.mxu0 0.0
    %327 = vmatprep.subr.mxu0 0.0
    %328 = vmatpush1.msra.mxu0 0.0
    %329 = vmatprep.subr.mxu0 0.0
    %330 = vmatpush1.msra.mxu0 0.0
    %331 = vmatprep.subr.mxu0 0.0
    %332 = vmatpush1.msra.mxu0 0.0
    %333 = vmatprep.subr.mxu0 0.0
    %334 = vmatpush1.msra.mxu0 0.0
    %335 = vmatprep.subr.mxu0 0.0
    %336 = vmatpush1.msra.mxu0 0.0
    %337 = vmatprep.subr.mxu0 0.0
    %338 = vmatpush1.msra.mxu0 0.0
    %339 = vmatprep.subr.mxu0 0.0
    %340 = vmatpush1.msra.mxu0 0.0
    %341 = vmatprep.subr.mxu0 0.0
    %342 = vmatpush1.msra.mxu0 0.0
    %343 = vmatprep.subr.mxu0 0.0
    %344 = vmatpush1.msra.mxu0 0.0
    %345 = vmatprep.subr.mxu0 0.0
    %346 = vmatpush1.msra.mxu0 0.0
    %347 = vmatprep.subr.mxu0 0.0
    %348 = vmatpush1.msra.mxu0 0.0
    %349 = vmatprep.subr.mxu0 0.0
    %350 = vmatpush1.msra.mxu0 0.0
    %351 = vmatprep.subr.mxu0 0.0
    %352 = vmatpush1.msra.mxu0 0.0
    %353 = vmatprep.subr.mxu0 0.0
    %354 = vmatpush1.msra.mxu0 0.0
    %355 = vmatprep.mubr.f32.mxu0 0.0
    %356 = vmatmul.mubr.f32.gmra.mrb[0].mxu0 %v266
    %v357 = vpop.f32.mrb[0].mxu0
    %v358 = vadd.f32 %v289, %v357
    %v359 = vpop.f32.mrb[0].mxu0
    %360 = vmatprep.mubr.f32.mxu0 0.0
    %361 = vmatmul.mubr.f32.gmra.mrb[0].mxu0 %v267
    %v362 = vpop.f32.mrb[0].mxu0
    %v363 = vadd.f32 %v289, %v362
    %v364 = vpop.f32.mrb[0].mxu0
    %365 = vdwg.mxu0
    %v366 = vmax.f32 %v358, 0.0
    %v367 = vmax.f32 %v363, 0.0
    %v368 = vld [vmem:[#allocation7] sm:$0xff]
    %v369 = vld [vmem:[#allocation7 + $0x8] sm:$0xff]
    %v370 = vld [vmem:[#allocation7 + $0x10] sm:$0xff]
    %v371 = vld [vmem:[#allocation7 + $0x18] sm:$0xff]
    %v372 = vld [vmem:[#allocation7 + $0x20] sm:$0xff]
    %v373 = vld [vmem:[#allocation7 + $0x28] sm:$0xff]
    %v374 = vld [vmem:[#allocation7 + $0x30] sm:$0xff]
    %v375 = vld [vmem:[#allocation7 + $0x38] sm:$0xff]
    %v376 = vld [vmem:[#allocation7 + $0x40] sm:$0xff]
    %v377 = vld [vmem:[#allocation7 + $0x48] sm:$0xff]
    %v378 = vld [vmem:[#allocation7 + $0x50] sm:$0xff]
    %v379 = vld [vmem:[#allocation7 + $0x58] sm:$0xff]
    %v380 = vld [vmem:[#allocation7 + $0x60] sm:$0xff]
    %v381 = vld [vmem:[#allocation7 + $0x68] sm:$0xff]
    %v382 = vld [vmem:[#allocation7 + $0x70] sm:$0xff]
    %v383 = vld [vmem:[#allocation7 + $0x78] sm:$0xff]
    %v384 = vld [vmem:[%s8] sm:$0x1]
    %v386 = vlaneseq
    %v387 = vshrl.u32 %v386, 7
    %v388 = vsub.s32 0, %v387
    %v389 = vrot.slane %v384, %v388
    %391 = vmatprep.subr.mxu0 0.0
    %392 = vmatpush1.msra.mxu0 %v368
    %393 = vmatprep.subr.mxu0 0.0
    %394 = vmatpush1.msra.mxu0 %v369
    %395 = vmatprep.subr.mxu0 0.0
    %396 = vmatpush1.msra.mxu0 %v370
    %397 = vmatprep.subr.mxu0 0.0
    %398 = vmatpush1.msra.mxu0 %v371
    %399 = vmatprep.subr.mxu0 0.0
    %400 = vmatpush1.msra.mxu0 %v372
    %401 = vmatprep.subr.mxu0 0.0
    %402 = vmatpush1.msra.mxu0 %v373
    %403 = vmatprep.subr.mxu0 0.0
    %404 = vmatpush1.msra.mxu0 %v374
    %405 = vmatprep.subr.mxu0 0.0
    %406 = vmatpush1.msra.mxu0 %v375
    %407 = vmatprep.subr.mxu0 0.0
    %408 = vmatpush1.msra.mxu0 %v376
    %409 = vmatprep.subr.mxu0 0.0
    %410 = vmatpush1.msra.mxu0 %v377
    %411 = vmatprep.subr.mxu0 0.0
    %412 = vmatpush1.msra.mxu0 %v378
    %413 = vmatprep.subr.mxu0 0.0
    %414 = vmatpush1.msra.mxu0 %v379
    %415 = vmatprep.subr.mxu0 0.0
    %416 = vmatpush1.msra.mxu0 %v380
    %417 = vmatprep.subr.mxu0 0.0
    %418 = vmatpush1.msra.mxu0 %v381
    %419 = vmatprep.subr.mxu0 0.0
    %420 = vmatpush1.msra.mxu0 %v382
    %421 = vmatprep.subr.mxu0 0.0
    %422 = vmatpush1.msra.mxu0 %v383
    %423 = vmatprep.subr.mxu0 0.0
    %424 = vmatpush1.msra.mxu0 0.0
    %425 = vmatprep.subr.mxu0 0.0
    %426 = vmatpush1.msra.mxu0 0.0
    %427 = vmatprep.subr.mxu0 0.0
    %428 = vmatpush1.msra.mxu0 0.0
    %429 = vmatprep.subr.mxu0 0.0
    %430 = vmatpush1.msra.mxu0 0.0
    %431 = vmatprep.subr.mxu0 0.0
    %432 = vmatpush1.msra.mxu0 0.0
    %433 = vmatprep.subr.mxu0 0.0
    %434 = vmatpush1.msra.mxu0 0.0
    %435 = vmatprep.subr.mxu0 0.0
    %436 = vmatpush1.msra.mxu0 0.0
    %437 = vmatprep.subr.mxu0 0.0
    %438 = vmatpush1.msra.mxu0 0.0
    %439 = vmatprep.subr.mxu0 0.0
    %440 = vmatpush1.msra.mxu0 0.0
    %441 = vmatprep.subr.mxu0 0.0
    %442 = vmatpush1.msra.mxu0 0.0
    %443 = vmatprep.subr.mxu0 0.0
    %444 = vmatpush1.msra.mxu0 0.0
    %445 = vmatprep.subr.mxu0 0.0
    %446 = vmatpush1.msra.mxu0 0.0
    %447 = vmatprep.subr.mxu0 0.0
    %448 = vmatpush1.msra.mxu0 0.0
    %449 = vmatprep.subr.mxu0 0.0
    %450 = vmatpush1.msra.mxu0 0.0
    %451 = vmatprep.subr.mxu0 0.0
    %452 = vmatpush1.msra.mxu0 0.0
    %453 = vmatprep.subr.mxu0 0.0
    %454 = vmatpush1.msra.mxu0 0.0
    %455 = vmatprep.mubr.f32.mxu0 0.0
    %456 = vmatmul.mubr.f32.gmra.mrb[0].mxu0 %v366
    %v457 = vpop.f32.mrb[0].mxu0
    %v458 = vadd.f32 %v389, %v457
    %v459 = vpop.f32.mrb[0].mxu0
    %460 = vmatprep.mubr.f32.mxu0 0.0
    %461 = vmatmul.mubr.f32.gmra.mrb[0].mxu0 %v367
    %v462 = vpop.f32.mrb[0].mxu0
    %v463 = vadd.f32 %v389, %v462
    %v464 = vpop.f32.mrb[0].mxu0
    %465 = vdwg.mxu0
    %v466 = vmul.f32 %v458, 0.5
    %v467 = vmul.f32 %v463, 0.5
    %v468 = vtanh.pop %v466
    %v469 = vtanh.pop %v467
    %v470 = vadd.f32 %v468, 1.0
    %v471 = vadd.f32 %v469, 1.0
    %v472 = vmul.f32 %v470, 0.5
    %v473 = vmul.f32 %v471, 0.5
    %474 = vst [vmem:[#allocation8] sm:$0xff] %v472
    %475 = vst [vmem:[#allocation8 + $0x8] sm:$0xff] %v473
    // Predicated region
    $region50: #{tpu_custom_call.1} parent=1 // pred_check
      _
    $region51: #{tpu_custom_call.1} parent=1 // pred_check_branch
      %477 = sbr.rel (0) target = $region53
    $region52: #{tpu_custom_call.1} parent=1 // pred_region
      %s479 = ssub.s32 256, 256
      %480 = vsyncadd [#allocation4], %s479
      %s481 = sshll.u32 [#allocation8], 4
      %s482 = int_to_ptr.vmem [resolvable:$true] %s481
      %487 = dma.vmem_to_hbm [thread:$0]  %s482, 256, %s9, [#allocation4], 128, 128, 8
    $region53: #{tpu_custom_call.1} parent=1 // pred_fallthru
      _
    // Predicated region
    $region54: #{tpu_custom_call.1} parent=1 // pred_check
      _
    $region55: #{tpu_custom_call.1} parent=1 // pred_check_branch
      %489 = sbr.rel (0) target = $region57
    $region56: #{tpu_custom_call.1} parent=1 // pred_region
      %490 = dma.done [#allocation4], 256
    $region57: #{tpu_custom_call.1} parent=1 // pred_fallthru
      _
    %491 = vsyncpa [#allocation3], 1
    %492 = vsyncpa [#allocation6], 1
    %493 = vsyncpa [#allocation4], 1

</llo_original>
